<compile_context>
chip_gen: v7x
topology: tpu7x:2x2x1
jax: 0.10.0
libtpu: 0.0.40
codegen_flags: <defaults>
</compile_context>

<pallas_src>
import jax
import jax.numpy as jnp
from jax.experimental import pallas as pl
from jax.experimental.pallas import tpu as pltpu


def _make_weightnet_kernel(in_channel, out_channel, c_pad, n_layers):
    """Kernel closure over static layer dims.

    x_ref:    (1, Cin, TILE_HW)        channels on sublanes, spatial on lanes
    slab_ref: (n_layers, C, C+1)       [W_k (zero-padded) | b_k] per layer
    o_ref:    (1, Cout, TILE_HW)
    """

    def kernel(x_ref, slab_ref, o_ref):
        h = x_ref[0].astype(jnp.float32)                  # (Cin, T)
        for k in range(n_layers):
            ncols = in_channel if k == 0 else c_pad       # static per layer
            wb = slab_ref[k]                              # (C, C+1), static index
            w = wb[:, :ncols]                             # (C, ncols)
            b = wb[:, c_pad:c_pad + 1]                    # (C, 1) lane-broadcast
            h = jnp.dot(w, h, preferred_element_type=jnp.float32) + b
            h = jnp.maximum(h, 0.0)                       # padded rows stay 0
        o_ref[0] = h[:out_channel].astype(o_ref.dtype)    # lane-dense store

    return kernel


def _pick_tile_hw(hw, batch, max_tile_hw=16384):
    """Large lane-dense tile; never a divisor requirement (cdiv grid + masked tail)."""
    r128 = lambda v: ((v + 127) // 128) * 128
    tile = min(max_tile_hw, r128(hw))
    if tile > hw >= 128:
        tile = (hw // 128) * 128          # avoid a block wider than the array
    n_tiles = (hw + tile - 1) // tile
    if batch * n_tiles < 2 and hw >= 256:
        # Keep >= 2 grid steps so both v7x TensorCores get work.
        tile = max(128, ((hw // 2) // 128) * 128)
    return tile


def _vmem_limit_bytes(cin, c_pad, cout, tile, n_layers):
    r8 = lambda v: ((v + 7) // 8) * 8
    bufs = 2 * (r8(cin) + r8(cout)) * tile * 4       # double-buffered in/out tiles
    inter = n_layers * c_pad * tile * 4              # f32 intermediates
    slab = 2 * n_layers * c_pad * 128 * 4            # resident weight slab (padded)
    est = bufs + inter + slab
    # Generous headroom, but stay well inside v7x's 64 MiB physical VMEM.
    return int(min(48 * 1024 * 1024, max(32 * 1024 * 1024, 2 * est)))


def _pack_params(params, c_pad):
    """Pack all layers into one (n_layers, C, C+1) f32 slab: [W | b], zero padded."""
    n = len(params)
    slab = jnp.zeros((n, c_pad, c_pad + 1), jnp.float32)
    for k, (w, b) in enumerate(params):
        co, ci = w.shape
        slab = slab.at[k, :co, :ci].set(w.astype(jnp.float32))
        slab = slab.at[k, :co, c_pad].set(b.astype(jnp.float32))
    return slab


def weightnet_forward(x_nchw, params, *, max_tile_hw=16384, out_dtype=None):
    """x_nchw: (B, Cin, H, W).  params: [(w, b), ...], w: (Cout_k, Cin_k), b: (Cout_k,)."""
    B, Cin, H, W = x_nchw.shape
    n_layers = len(params)
    dims = [Cin] + [w.shape[0] for w, _ in params]
    Cout = dims[-1]
    c_pad = max(8, ((max(dims[1:]) + 7) // 8) * 8)
    out_dtype = x_nchw.dtype if out_dtype is None else jnp.dtype(out_dtype)

    HW = H * W
    tile_hw = _pick_tile_hw(HW, B, max_tile_hw)
    n_tiles = (HW + tile_hw - 1) // tile_hw

    # NCHW -> (B, Cin, H*W): metadata-only reshape, no HBM pass; no padding pass.
    x_flat = x_nchw.reshape(B, Cin, HW)
    slab = _pack_params(params, c_pad)

    kernel = _make_weightnet_kernel(Cin, Cout, c_pad, n_layers)

    flops = 2 * B * HW * sum(a * b for a, b in zip(dims[:-1], dims[1:]))
    bytes_accessed = int(
        B * HW * (Cin * x_nchw.dtype.itemsize + Cout * jnp.dtype(out_dtype).itemsize)
        + slab.size * 4)

    out_flat = pl.pallas_call(
        kernel,
        out_shape=jax.ShapeDtypeStruct((B, Cout, HW), out_dtype),
        grid_spec=pltpu.PrefetchScalarGridSpec(
            num_scalar_prefetch=0,
            grid=(B, n_tiles),
            in_specs=[
                pl.BlockSpec((1, Cin, tile_hw), lambda b, t: (b, 0, t)),
                pl.BlockSpec(slab.shape, lambda b, t: (0, 0, 0)),  # resident slab
            ],
            out_specs=pl.BlockSpec((1, Cout, tile_hw), lambda b, t: (b, 0, t)),
        ),
        compiler_params=pltpu.CompilerParams(
            dimension_semantics=("parallel", "parallel"),
            vmem_limit_bytes=_vmem_limit_bytes(Cin, c_pad, Cout, tile_hw, n_layers)),
        cost_estimate=pl.CostEstimate(
            flops=flops, transcendentals=0, bytes_accessed=bytes_accessed),
    )(x_flat, slab)

    # (B, Cout, H*W) -> NCHW: free reshape, no slice pass (ragged tail handled in-grid).
    return out_flat.reshape(B, Cout, H, W)


def init_weightnet_params(key, in_channel, out_channel, hidden_unit=(8, 8)):
    """Synthetic parameters in PyTorch Conv2d layout: w (Cout, Cin), b (Cout,)."""
    dims = [in_channel, *hidden_unit, out_channel]
    params = []
    for cin, cout in zip(dims[:-1], dims[1:]):
        key, kw, kb = jax.random.split(key, 3)
        bound = 1.0 / jnp.sqrt(cin)  # kaiming-uniform style bound for a 1x1 conv
        w = jax.random.uniform(kw, (cout, cin), jnp.float32, -bound, bound)
        b = jax.random.uniform(kb, (cout,), jnp.float32, -bound, bound)
        params.append((w, b))
    return params


def weightnet_reference(x_nchw, params):
    """Pure-JAX reference mirroring the PyTorch forward (1x1 conv + ReLU chain)."""
    h = x_nchw
    for w, b in params:
        h = jnp.maximum(
            jnp.einsum("oc,bchw->bohw", w, h) + b[None, :, None, None], 0.0)
    return h


if __name__ == "__main__":
    key = jax.random.PRNGKey(0)
    kx, kp, kx2 = jax.random.split(key, 3)

    # WeightNet is applied to localized_xyz: (B, 3, nsample, npoint)
    B, in_channel, nsample, npoint = 2, 3, 8, 16
    out_channel = 16
    params = init_weightnet_params(kp, in_channel, out_channel, hidden_unit=(8, 8))

    x = jax.random.normal(kx, (B, in_channel, nsample, npoint), jnp.float32)
    out = jax.block_until_ready(weightnet_forward(x, params))
    ref = weightnet_reference(x, params)
    assert out.shape == (B, out_channel, nsample, npoint), out.shape
    assert jnp.allclose(out, ref, atol=1e-5, rtol=1e-5), "mismatch vs reference"

    # Ragged spatial extent (H*W not a multiple of 128): exercises the cdiv grid
    # and the masked tail tile (no wrapper pad / slice passes).
    x2 = jax.random.normal(kx2, (1, in_channel, 8, 21), jnp.float32)
    out2 = jax.block_until_ready(weightnet_forward(x2, params))
    ref2 = weightnet_reference(x2, params)
    assert out2.shape == ref2.shape, out2.shape
    assert jnp.allclose(out2, ref2, atol=1e-5, rtol=1e-5), "mismatch vs reference (ragged)"

    print("KERNEL_OK")
</pallas_src>

<mosaic_0001>
module attributes {stable_mosaic.version = 11 : i64} {
  func.func @kernel(%arg0: i32, %arg1: i32, %arg2: memref<1x3x128xf32, #tpu.memory_space<vmem>>, %arg3: memref<3x16x17xf32, #tpu.memory_space<vmem>>, %arg4: memref<1x16x128xf32, #tpu.memory_space<vmem>>) attributes {dimension_semantics = [#tpu.dimension_semantics<parallel>, #tpu.dimension_semantics<parallel>], iteration_bounds = array<i64: 2, 1>, scalar_prefetch = 0 : i64, scratch_operands = 0 : i64, tpu.core_type = #tpu.core_type<tc>, window_params = [{transform_indices = @transform_0, window_bounds = array<i64: 1, 3, 128>}, {pipeline_mode = #tpu.pipeline_mode<synchronous>, transform_indices = @transform_1, window_bounds = array<i64: 3, 16, 17>}, {transform_indices = @transform_2, window_bounds = array<i64: 1, 16, 128>}]} {
    %c0 = arith.constant 0 : index
    %c0_0 = arith.constant 0 : index
    %c0_1 = arith.constant 0 : index
    %0 = vector.load %arg2[%c0, %c0_0, %c0_1] : memref<1x3x128xf32, #tpu.memory_space<vmem>>, vector<1x3x128xf32>
    %1 = vector.shape_cast %0 : vector<1x3x128xf32> to vector<3x128xf32>
    %c0_2 = arith.constant 0 : index
    %c0_3 = arith.constant 0 : index
    %c0_4 = arith.constant 0 : index
    %2 = vector.load %arg3[%c0_2, %c0_3, %c0_4] : memref<3x16x17xf32, #tpu.memory_space<vmem>>, vector<1x16x17xf32>
    %3 = vector.shape_cast %2 : vector<1x16x17xf32> to vector<16x17xf32>
    %4 = vector.extract_strided_slice %3 {offsets = [0, 0], sizes = [16, 3], strides = [1, 1]} : vector<16x17xf32> to vector<16x3xf32>
    %5 = vector.extract_strided_slice %3 {offsets = [0, 16], sizes = [16, 1], strides = [1, 1]} : vector<16x17xf32> to vector<16x1xf32>
    %cst = arith.constant dense<0.000000e+00> : vector<16x128xf32>
    %6 = tpu.matmul %4, %1, %cst {dimension_numbers = #tpu.dot_dimension_numbers<[1], [0], [0], [1], [0, 0, 1, 1], [], []>} : vector<16x3xf32>, vector<3x128xf32>, vector<16x128xf32> -> vector<16x128xf32>
    %7 = vector.broadcast %5 : vector<16x1xf32> to vector<16x128xf32>
    %8 = arith.addf %6, %7 : vector<16x128xf32>
    %cst_5 = arith.constant 0.000000e+00 : f32
    %9 = vector.broadcast %cst_5 : f32 to vector<16x128xf32>
    %10 = arith.maximumf %8, %9 : vector<16x128xf32>
    %c1 = arith.constant 1 : index
    %c0_6 = arith.constant 0 : index
    %c0_7 = arith.constant 0 : index
    %11 = vector.load %arg3[%c1, %c0_6, %c0_7] : memref<3x16x17xf32, #tpu.memory_space<vmem>>, vector<1x16x17xf32>
    %12 = vector.shape_cast %11 : vector<1x16x17xf32> to vector<16x17xf32>
    %13 = vector.extract_strided_slice %12 {offsets = [0, 0], sizes = [16, 16], strides = [1, 1]} : vector<16x17xf32> to vector<16x16xf32>
    %14 = vector.extract_strided_slice %12 {offsets = [0, 16], sizes = [16, 1], strides = [1, 1]} : vector<16x17xf32> to vector<16x1xf32>
    %cst_8 = arith.constant dense<0.000000e+00> : vector<16x128xf32>
    %15 = tpu.matmul %13, %10, %cst_8 {dimension_numbers = #tpu.dot_dimension_numbers<[1], [0], [0], [1], [0, 0, 1, 1], [], []>} : vector<16x16xf32>, vector<16x128xf32>, vector<16x128xf32> -> vector<16x128xf32>
    %16 = vector.broadcast %14 : vector<16x1xf32> to vector<16x128xf32>
    %17 = arith.addf %15, %16 : vector<16x128xf32>
    %cst_9 = arith.constant 0.000000e+00 : f32
    %18 = vector.broadcast %cst_9 : f32 to vector<16x128xf32>
    %19 = arith.maximumf %17, %18 : vector<16x128xf32>
    %c2 = arith.constant 2 : index
    %c0_10 = arith.constant 0 : index
    %c0_11 = arith.constant 0 : index
    %20 = vector.load %arg3[%c2, %c0_10, %c0_11] : memref<3x16x17xf32, #tpu.memory_space<vmem>>, vector<1x16x17xf32>
    %21 = vector.shape_cast %20 : vector<1x16x17xf32> to vector<16x17xf32>
    %22 = vector.extract_strided_slice %21 {offsets = [0, 0], sizes = [16, 16], strides = [1, 1]} : vector<16x17xf32> to vector<16x16xf32>
    %23 = vector.extract_strided_slice %21 {offsets = [0, 16], sizes = [16, 1], strides = [1, 1]} : vector<16x17xf32> to vector<16x1xf32>
    %cst_12 = arith.constant dense<0.000000e+00> : vector<16x128xf32>
    %24 = tpu.matmul %22, %19, %cst_12 {dimension_numbers = #tpu.dot_dimension_numbers<[1], [0], [0], [1], [0, 0, 1, 1], [], []>} : vector<16x16xf32>, vector<16x128xf32>, vector<16x128xf32> -> vector<16x128xf32>
    %25 = vector.broadcast %23 : vector<16x1xf32> to vector<16x128xf32>
    %26 = arith.addf %24, %25 : vector<16x128xf32>
    %cst_13 = arith.constant 0.000000e+00 : f32
    %27 = vector.broadcast %cst_13 : f32 to vector<16x128xf32>
    %28 = arith.maximumf %26, %27 : vector<16x128xf32>
    %c0_14 = arith.constant 0 : index
    %c0_15 = arith.constant 0 : index
    %c0_16 = arith.constant 0 : index
    %29 = vector.load %arg4[%c0_14, %c0_15, %c0_16] : memref<1x16x128xf32, #tpu.memory_space<vmem>>, vector<1x16x128xf32>
    %30 = vector.shape_cast %29 : vector<1x16x128xf32> to vector<16x128xf32>
    %31 = vector.shape_cast %28 : vector<16x128xf32> to vector<1x16x128xf32>
    tpu.vector_store %arg4[%c0_14, %c0_15, %c0_16], %31 {strides = array<i32>} : memref<1x16x128xf32, #tpu.memory_space<vmem>>, vector<1x16x128xf32>,
    return
  }
  func.func @transform_0(%arg0: i32, %arg1: i32) -> (i32, i32, i32) {
    %c0_i32 = arith.constant 0 : i32
    %c0_i32_0 = arith.constant 0 : i32
    return %arg0, %c0_i32, %arg1 : i32, i32, i32
  }
  func.func @transform_1(%arg0: i32, %arg1: i32) -> (i32, i32, i32) {
    %c0_i32 = arith.constant 0 : i32
    %c0_i32_0 = arith.constant 0 : i32
    %c0_i32_1 = arith.constant 0 : i32
    %c0_i32_2 = arith.constant 0 : i32
    return %c0_i32, %c0_i32_0, %c0_i32_1 : i32, i32, i32
  }
  func.func @transform_2(%arg0: i32, %arg1: i32) -> (i32, i32, i32) {
    %c0_i32 = arith.constant 0 : i32
    %c0_i32_0 = arith.constant 0 : i32
    return %arg0, %c0_i32, %arg1 : i32, i32, i32
  }
}

</mosaic_0001>

<llo_original>
// kernel: tpu_custom_call.1
$region0: #{tpu_custom_call.1}
  #allocation0 [shape = 'u32[]', space=smem, size = 0x4, offset = 0x4, fixed_abs, tag = 'smem constant byte address 0x4 - core index']
  #allocation1 [shape = 'u32[144,128]{1,0:T(1,128)}', space=vmem, size = 0x12000, scoped, tag = 'internal scratch']
  %s0 = inlined_call_operand.vmem [shape: f32[2,3,128], index: 0, kind: input, shape index: {}]
  %s1 = inlined_call_operand.hbm [shape: f32[3,16,17], index: 1, kind: input, shape index: {}]
  %s2 = inlined_call_operand.hbm [shape: f32[2,16,128], index: 2, kind: output, shape index: {}]
  %s3 = sld [smem:[#allocation0]]
  $region45: #{tpu_custom_call.1} parent=0
    _
  %s5 = ssub.s32 1, %s3
  %s6 = scalar_select 0, %s5, %s3
  $region1: #{tpu_custom_call.1} parent=0
    #allocation2 [shape = 'u8[24576]{0}', space=vmem, size = 0x6000, scoped, tag = 'input window, operand 1, single buffered']
    #allocation3 [shape = 's32[2]{0}', space=sflag, size = 0x8, scoped, tag = 'scoped memory for tpu_custom_call.1']
    #allocation4 [shape = 's32[2]{0}', space=sflag, size = 0x8, scoped, tag = 'scoped memory for tpu_custom_call.1']
    #allocation5 [shape = 'u8[16384]{0}', space=vmem, size = 0x4000, scoped, tag = 'output window, operand 0']
    %7 = vsyncpa [#allocation3], 0
    %8 = vsyncpa [#allocation4], 0
    %s9 = scalar_lea.sflag [#allocation4], 1
    %10 = vsyncpa %s9, 0
    loop: start=0, step=1, limit=4
    $region2: #{tpu_custom_call.1} parent=1 // loop_pre_header
      _
    $region3: #{tpu_custom_call.1} parent=1 // loop_header
      %s12 = sphi 0, %s16
      %p13 = scmp.ge.s32.totalorder %s12, 4
      %s19 = sphi 0, %s31
      %s20 = sphi 0, %s27
      %s21 = sphi 0, %s19
      %s22 = sphi 0, %s20
      %s23 = sphi 0, %s21
      %s24 = sphi 0, %s22
      %s36 = sphi 0, %s38
      %s39 = sphi 0, %s36
      %s40 = sphi 0, %s39
      %s56 = sphi 0, %s40
      %s60 = sphi 0, %s60
      %s62 = sphi 0, %s60
      %s63 = sphi 0, %s62
      %s77 = sphi 0, %s63
      %s85 = sphi 0, %s87
      %s88 = sphi 0, %s85
      %s89 = sphi 0, %s88
      %s105 = sphi 0, %s89
    $region4: #{tpu_custom_call.1} parent=1 // loop_header_branch
      %15 = sbr.rel (%p13) target = $region8
    $region5: #{tpu_custom_call.1} parent=1 // loop_body
      %s17 = ssub.s32 %s12, 1
      %s18 = ssub.s32 %s12, 2
      %s25 = sadd.s32 1, %s20
      %p26 = scmp.ge.s32.totalorder %s25, 1
      %s27 = scalar_select %p26, 0, %s25
      %s28 = sadd.s32 1, %s19
      %s29 = scalar_select %p26, %s28, %s19
      %p30 = scmp.ge.s32.totalorder %s29, 2
      %s31 = scalar_select %p30, 0, %s29
      %s32 = ssub.s32 %s19, %s31
      %s33 = ssub.s32 %s20, %s27
      %s34 = sor.u32 %s32, %s33
      %p35 = scmp.eq.s32.totalorder %s34, 0
      %s37 = sadd.s32 %s36, 1
      %s38 = scalar_select %p35, %s36, %s37
      %p41 = pneg %p35
      %p42 = scmp.eq.s32.totalorder %s12, 1
      %p43 = por %p41, %p42
      %p44 = scmp.ne.s32.totalorder %s36, %s39
      %p45 = scmp.eq.s32.totalorder %s12, 0
      %p46 = por %p44, %p45
      %p47 = scmp.ne.s32.totalorder %s36, %s39
      %p48 = scmp.eq.s32.totalorder %s17, 1
      %p49 = por %p47, %p48
      %p50 = scmp.ne.s32.totalorder %s39, %s40
      %p51 = scmp.eq.s32.totalorder %s17, 0
      %p52 = por %p50, %p51
      %p53 = scmp.ne.s32.totalorder %s39, %s40
      %p54 = scmp.eq.s32.totalorder %s18, 1
      %p55 = por %p53, %p54
      %p57 = scmp.ne.s32.totalorder %s40, %s56
      %p58 = scmp.eq.s32.totalorder %s18, 0
      %p59 = por %p57, %p58
      %s61 = sadd.s32 %s60, 1
      %p64 = scmp.eq.s32.totalorder %s12, 1
      %p65 = scmp.ne.s32.totalorder %s60, %s62
      %p66 = scmp.eq.s32.totalorder %s12, 0
      %p67 = por %p65, %p66
      %p68 = scmp.ne.s32.totalorder %s60, %s62
      %p69 = scmp.eq.s32.totalorder %s17, 1
      %p70 = por %p68, %p69
      %p71 = scmp.ne.s32.totalorder %s62, %s63
      %p72 = scmp.eq.s32.totalorder %s17, 0
      %p73 = por %p71, %p72
      %p74 = scmp.ne.s32.totalorder %s62, %s63
      %p75 = scmp.eq.s32.totalorder %s18, 1
      %p76 = por %p74, %p75
      %p78 = scmp.ne.s32.totalorder %s63, %s77
      %p79 = scmp.eq.s32.totalorder %s18, 0
      %p80 = por %p78, %p79
      %s81 = ssub.s32 %s19, %s31
      %s82 = ssub.s32 %s20, %s27
      %s83 = sor.u32 %s81, %s82
      %p84 = scmp.eq.s32.totalorder %s83, 0
      %s86 = sadd.s32 %s85, 1
      %s87 = scalar_select %p84, %s85, %s86
      %p90 = pneg %p84
      %p91 = scmp.eq.s32.totalorder %s12, 1
      %p92 = por %p90, %p91
      %p93 = scmp.ne.s32.totalorder %s85, %s88
      %p94 = scmp.eq.s32.totalorder %s12, 0
      %p95 = por %p93, %p94
      %p96 = scmp.ne.s32.totalorder %s85, %s88
      %p97 = scmp.eq.s32.totalorder %s17, 1
      %p98 = por %p96, %p97
      %p99 = scmp.ne.s32.totalorder %s88, %s89
      %p100 = scmp.eq.s32.totalorder %s17, 0
      %p101 = por %p99, %p100
      %p102 = scmp.ne.s32.totalorder %s88, %s89
      %p103 = scmp.eq.s32.totalorder %s18, 1
      %p104 = por %p102, %p103
      %p106 = scmp.ne.s32.totalorder %s89, %s105
      %p107 = scmp.eq.s32.totalorder %s18, 0
      %p108 = por %p106, %p107
      %p109 = scmp.le.s32.totalorder 1, %s12
      %p110 = scmp.lt.s32.totalorder %s12, 3
      %p111 = pnand %p109, %p110
      %p112 = pneg %p111
      // Predicated region
      $region9: #{tpu_custom_call.1} parent=5 // pred_check
        _
      $region10: #{tpu_custom_call.1} parent=5 // pred_check_branch
        %114 = sbr.rel (%p111) target = $region12
      $region11: #{tpu_custom_call.1} parent=5 // pred_region
        %s115 = ssub.s32 %s12, 1
        // Predicated region
        $region13: #{tpu_custom_call.1} parent=11 // pred_check
          %p116 = pneg %p73
        $region14: #{tpu_custom_call.1} parent=11 // pred_check_branch
          %118 = sbr.rel (%p116) target = $region16
        $region15: #{tpu_custom_call.1} parent=11 // pred_region
          %s120 = ssub.s32 768, 768
          %121 = vsyncadd [#allocation3], %s120
          %s122 = sshll.u32 [#allocation2], 4
          %s123 = int_to_ptr.vmem [resolvable:$true] %s122
          %128 = dma.hbm_to_vmem [thread:$0]  %s1, 768, %s123, [#allocation3], 128, 128, 8
        $region16: #{tpu_custom_call.1} parent=11 // pred_fallthru
          _
      $region12: #{tpu_custom_call.1} parent=5 // pred_fallthru
        _
      %p129 = scmp.lt.s32.totalorder %s12, 2
      // Predicated region
      $region17: #{tpu_custom_call.1} parent=5 // pred_check
        %p130 = pneg %p129
      $region18: #{tpu_custom_call.1} parent=5 // pred_check_branch
        %132 = sbr.rel (%p130) target = $region20
      $region19: #{tpu_custom_call.1} parent=5 // pred_region
        // Predicated region
        $region21: #{tpu_custom_call.1} parent=19 // pred_check
          %p133 = pneg %p46
        $region22: #{tpu_custom_call.1} parent=19 // pred_check_branch
          %135 = sbr.rel (%p133) target = $region24
        $region23: #{tpu_custom_call.1} parent=19 // pred_region
          %p136 = scmp.lt.s32.totalorder %s19, 1
          %s137 = scalar_select %p136, %s19, 1
          %p138 = scmp.lt.s32.totalorder %s20, 0
          %s139 = scalar_select %p138, %s20, 0
          %s140 = sadd.s32 %s139, %s137
          %s141 = smul.addr %s140, 4
          %s142 = scalar_lea.vmem %s0, %s141
        $region24: #{tpu_custom_call.1} parent=19 // pred_fallthru
          _
      $region20: #{tpu_custom_call.1} parent=5 // pred_fallthru
        _
      %p143 = scmp.le.s32.totalorder 1, %s12
      %p144 = scmp.lt.s32.totalorder %s12, 3
      %p145 = pnand %p143, %p144
      %p146 = pneg %p145
      // Predicated region
      $region25: #{tpu_custom_call.1} parent=5 // pred_check
        _
      $region26: #{tpu_custom_call.1} parent=5 // pred_check_branch
        %148 = sbr.rel (%p145) target = $region28
      $region27: #{tpu_custom_call.1} parent=5 // pred_region
        %s149 = ssub.s32 %s12, 1
        // Predicated region
        $region29: #{tpu_custom_call.1} parent=27 // pred_check
          %p150 = pneg %p73
        $region30: #{tpu_custom_call.1} parent=27 // pred_check_branch
          %152 = sbr.rel (%p150) target = $region32
        $region31: #{tpu_custom_call.1} parent=27 // pred_region
          %153 = dma.done [#allocation3], 768
        $region32: #{tpu_custom_call.1} parent=27 // pred_fallthru
          _
        %p154 = scmp.lt.s32.totalorder %s21, 1
        %s155 = scalar_select %p154, %s21, 1
        %p156 = scmp.lt.s32.totalorder %s22, 0
        %s157 = scalar_select %p156, %s22, 0
        %s158 = sadd.s32 %s157, %s155
        %s159 = smul.addr %s158, 4
        %s160 = scalar_lea.vmem %s0, %s159
        %p161 = pneg %p52
        %p162 = pneg %p49
        %p163 = pneg %p73
        %p164 = pneg %p70
        %p165 = pneg %p101
        %p166 = pneg %p98
        %s167 = sand.u32 %s88, 1
        %s168 = scalar_lea.sflag [#allocation4], %s167
        %s169 = sand.u32 %s88, 1
        %s170 = smul.addr %s169, 16
        %s171 = scalar_lea.vmem [#allocation5], %s170
        %p172 = scmp.lt.s32.totalorder %s21, 1
        %s173 = scalar_select %p172, %s21, 1
        %p174 = scmp.lt.s32.totalorder %s22, 0
        %s175 = scalar_select %p174, %s22, 0
        %s176 = sadd.s32 %s175, %s173
        %s177 = smul.addr %s176, 4
        %s178 = scalar_lea.vmem %s0, %s177
        %v179 = vld [vmem:[%s178] sm:$0x7]
        %v180 = vld [vmem:[#allocation2] sm:$0xff]
        %v181 = vld [vmem:[#allocation2 + $0x8] sm:$0xff]
        %183 = vset.pattern.permute.xlu0 16
        %184 = vperm.xlu0 %183, %v180
        %v185 = vpop.permute.xlu0 %184
        %188 = vset.pattern.permute.xlu0 16
        %189 = vperm.xlu0 %188, %v181
        %v190 = vpop.permute.xlu0 %189
        %vm192 = vcmask 23552
        %v193 = vsel %vm192, %v180, 0
        %v195 = vsel %vm192, %v181, 0
        %vm197 = vcmask 1042432
        %v199 = vsel %vm197, %v179, 0
        %201 = vmatprep.subr.mxu0 0.0
        %202 = vmatpush1.msra.mxu0 %v199
        %203 = vmatprep.subr.mxu0 0.0
        %204 = vmatpush1.msra.mxu0 0.0
        %205 = vmatprep.subr.mxu0 0.0
        %206 = vmatpush1.msra.mxu0 0.0
        %207 = vmatprep.subr.mxu0 0.0
        %208 = vmatpush1.msra.mxu0 0.0
        %209 = vmatprep.subr.mxu0 0.0
        %210 = vmatpush1.msra.mxu0 0.0
        %211 = vmatprep.subr.mxu0 0.0
        %212 = vmatpush1.msra.mxu0 0.0
        %213 = vmatprep.subr.mxu0 0.0
        %214 = vmatpush1.msra.mxu0 0.0
        %215 = vmatprep.subr.mxu0 0.0
        %216 = vmatpush1.msra.mxu0 0.0
        %217 = vmatprep.subr.mxu0 0.0
        %218 = vmatpush1.msra.mxu0 0.0
        %219 = vmatprep.subr.mxu0 0.0
        %220 = vmatpush1.msra.mxu0 0.0
        %221 = vmatprep.subr.mxu0 0.0
        %222 = vmatpush1.msra.mxu0 0.0
        %223 = vmatprep.subr.mxu0 0.0
        %224 = vmatpush1.msra.mxu0 0.0
        %225 = vmatprep.subr.mxu0 0.0
        %226 = vmatpush1.msra.mxu0 0.0
        %227 = vmatprep.subr.mxu0 0.0
        %228 = vmatpush1.msra.mxu0 0.0
        %229 = vmatprep.subr.mxu0 0.0
        %230 = vmatpush1.msra.mxu0 0.0
        %231 = vmatprep.subr.mxu0 0.0
        %232 = vmatpush1.msra.mxu0 0.0
        %233 = vmatprep.subr.mxu0 0.0
        %234 = vmatpush1.msra.mxu0 0.0
        %235 = vmatprep.subr.mxu0 0.0
        %236 = vmatpush1.msra.mxu0 0.0
        %237 = vmatprep.subr.mxu0 0.0
        %238 = vmatpush1.msra.mxu0 0.0
        %239 = vmatprep.subr.mxu0 0.0
        %240 = vmatpush1.msra.mxu0 0.0
        %241 = vmatprep.subr.mxu0 0.0
        %242 = vmatpush1.msra.mxu0 0.0
        %243 = vmatprep.subr.mxu0 0.0
        %244 = vmatpush1.msra.mxu0 0.0
        %245 = vmatprep.subr.mxu0 0.0
        %246 = vmatpush1.msra.mxu0 0.0
        %247 = vmatprep.subr.mxu0 0.0
        %248 = vmatpush1.msra.mxu0 0.0
        %249 = vmatprep.subr.mxu0 0.0
        %250 = vmatpush1.msra.mxu0 0.0
        %251 = vmatprep.subr.mxu0 0.0
        %252 = vmatpush1.msra.mxu0 0.0
        %253 = vmatprep.subr.mxu0 0.0
        %254 = vmatpush1.msra.mxu0 0.0
        %255 = vmatprep.subr.mxu0 0.0
        %256 = vmatpush1.msra.mxu0 0.0
        %257 = vmatprep.subr.mxu0 0.0
        %258 = vmatpush1.msra.mxu0 0.0
        %259 = vmatprep.subr.mxu0 0.0
        %260 = vmatpush1.msra.mxu0 0.0
        %261 = vmatprep.subr.mxu0 0.0
        %262 = vmatpush1.msra.mxu0 0.0
        %263 = vmatprep.subr.mxu0 0.0
        %264 = vmatpush1.msra.mxu0 0.0
        %265 = vmatprep.mubr.f32.mxu0 0.0
        %266 = vmatmul.mubr.f32.gmra.mrb[0].mxu0 %v193
        %v267 = vpop.f32.mrb[0].mxu0
        %v268 = vadd.f32 %v185, %v267
        %v269 = vpop.f32.mrb[0].mxu0
        %270 = vmatprep.mubr.f32.mxu0 0.0
        %271 = vmatmul.mubr.f32.gmra.mrb[0].mxu0 %v195
        %v272 = vpop.f32.mrb[0].mxu0
        %v273 = vadd.f32 %v190, %v272
        %v274 = vpop.f32.mrb[0].mxu0
        %275 = vdwg.mxu0
        %v276 = vmax.f32 %v268, 0.0
        %v277 = vmax.f32 %v273, 0.0
        %s278 = scalar_lea.vmem [#allocation2], 16
        %v279 = vld [vmem:[%s278] sm:$0xff]
        %v280 = vld [vmem:[%s278 + $0x8] sm:$0xff]
        %282 = vset.pattern.permute.xlu0 16
        %283 = vperm.xlu0 %282, %v279
        %v284 = vpop.permute.xlu0 %283
        %287 = vset.pattern.permute.xlu0 16
        %288 = vperm.xlu0 %287, %v280
        %v289 = vpop.permute.xlu0 %288
        %vm291 = vcmask 130048
        %v292 = vsel %vm291, %v279, 0
        %v294 = vsel %vm291, %v280, 0
        %296 = vmatprep.subr.mxu0 0.0
        %297 = vmatpush1.msra.mxu0 %v276
        %298 = vmatprep.subr.mxu0 0.0
        %299 = vmatpush1.msra.mxu0 %v277
        %300 = vmatprep.subr.mxu0 0.0
        %301 = vmatpush1.msra.mxu0 0.0
        %302 = vmatprep.subr.mxu0 0.0
        %303 = vmatpush1.msra.mxu0 0.0
        %304 = vmatprep.subr.mxu0 0.0
        %305 = vmatpush1.msra.mxu0 0.0
        %306 = vmatprep.subr.mxu0 0.0
        %307 = vmatpush1.msra.mxu0 0.0
        %308 = vmatprep.subr.mxu0 0.0
        %309 = vmatpush1.msra.mxu0 0.0
        %310 = vmatprep.subr.mxu0 0.0
        %311 = vmatpush1.msra.mxu0 0.0
        %312 = vmatprep.subr.mxu0 0.0
        %313 = vmatpush1.msra.mxu0 0.0
        %314 = vmatprep.subr.mxu0 0.0
        %315 = vmatpush1.msra.mxu0 0.0
        %316 = vmatprep.subr.mxu0 0.0
        %317 = vmatpush1.msra.mxu0 0.0
        %318 = vmatprep.subr.mxu0 0.0
        %319 = vmatpush1.msra.mxu0 0.0
        %320 = vmatprep.subr.mxu0 0.0
        %321 = vmatpush1.msra.mxu0 0.0
        %322 = vmatprep.subr.mxu0 0.0
        %323 = vmatpush1.msra.mxu0 0.0
        %324 = vmatprep.subr.mxu0 0.0
        %325 = vmatpush1.msra.mxu0 0.0
        %326 = vmatprep.subr.mxu0 0.0
        %327 = vmatpush1.msra.mxu0 0.0
        %328 = vmatprep.subr.mxu0 0.0
        %329 = vmatpush1.msra.mxu0 0.0
        %330 = vmatprep.subr.mxu0 0.0
        %331 = vmatpush1.msra.mxu0 0.0
        %332 = vmatprep.subr.mxu0 0.0
        %333 = vmatpush1.msra.mxu0 0.0
        %334 = vmatprep.subr.mxu0 0.0
        %335 = vmatpush1.msra.mxu0 0.0
        %336 = vmatprep.subr.mxu0 0.0
        %337 = vmatpush1.msra.mxu0 0.0
        %338 = vmatprep.subr.mxu0 0.0
        %339 = vmatpush1.msra.mxu0 0.0
        %340 = vmatprep.subr.mxu0 0.0
        %341 = vmatpush1.msra.mxu0 0.0
        %342 = vmatprep.subr.mxu0 0.0
        %343 = vmatpush1.msra.mxu0 0.0
        %344 = vmatprep.subr.mxu0 0.0
        %345 = vmatpush1.msra.mxu0 0.0
        %346 = vmatprep.subr.mxu0 0.0
        %347 = vmatpush1.msra.mxu0 0.0
        %348 = vmatprep.subr.mxu0 0.0
        %349 = vmatpush1.msra.mxu0 0.0
        %350 = vmatprep.subr.mxu0 0.0
        %351 = vmatpush1.msra.mxu0 0.0
        %352 = vmatprep.subr.mxu0 0.0
        %353 = vmatpush1.msra.mxu0 0.0
        %354 = vmatprep.subr.mxu0 0.0
        %355 = vmatpush1.msra.mxu0 0.0
        %356 = vmatprep.subr.mxu0 0.0
        %357 = vmatpush1.msra.mxu0 0.0
        %358 = vmatprep.subr.mxu0 0.0
        %359 = vmatpush1.msra.mxu0 0.0
        %360 = vmatprep.mubr.f32.mxu0 0.0
        %361 = vmatmul.mubr.f32.gmra.mrb[0].mxu0 %v292
        %v362 = vpop.f32.mrb[0].mxu0
        %v363 = vadd.f32 %v284, %v362
        %v364 = vpop.f32.mrb[0].mxu0
        %365 = vmatprep.mubr.f32.mxu0 0.0
        %366 = vmatmul.mubr.f32.gmra.mrb[0].mxu0 %v294
        %v367 = vpop.f32.mrb[0].mxu0
        %v368 = vadd.f32 %v289, %v367
        %v369 = vpop.f32.mrb[0].mxu0
        %370 = vdwg.mxu0
        %v371 = vmax.f32 %v363, 0.0
        %v372 = vmax.f32 %v368, 0.0
        %s373 = scalar_lea.vmem [#allocation2], 32
        %v374 = vld [vmem:[%s373] sm:$0xff]
        %v375 = vld [vmem:[%s373 + $0x8] sm:$0xff]
        %377 = vset.pattern.permute.xlu0 16
        %378 = vperm.xlu0 %377, %v374
        %v379 = vpop.permute.xlu0 %378
        %382 = vset.pattern.permute.xlu0 16
        %383 = vperm.xlu0 %382, %v375
        %v384 = vpop.permute.xlu0 %383
        %v386 = vsel %vm291, %v374, 0
        %v388 = vsel %vm291, %v375, 0
        %390 = vmatprep.subr.mxu0 0.0
        %391 = vmatpush1.msra.mxu0 %v371
        %392 = vmatprep.subr.mxu0 0.0
        %393 = vmatpush1.msra.mxu0 %v372
        %394 = vmatprep.subr.mxu0 0.0
        %395 = vmatpush1.msra.mxu0 0.0
        %396 = vmatprep.subr.mxu0 0.0
        %397 = vmatpush1.msra.mxu0 0.0
        %398 = vmatprep.subr.mxu0 0.0
        %399 = vmatpush1.msra.mxu0 0.0
        %400 = vmatprep.subr.mxu0 0.0
        %401 = vmatpush1.msra.mxu0 0.0
        %402 = vmatprep.subr.mxu0 0.0
        %403 = vmatpush1.msra.mxu0 0.0
        %404 = vmatprep.subr.mxu0 0.0
        %405 = vmatpush1.msra.mxu0 0.0
        %406 = vmatprep.subr.mxu0 0.0
        %407 = vmatpush1.msra.mxu0 0.0
        %408 = vmatprep.subr.mxu0 0.0
        %409 = vmatpush1.msra.mxu0 0.0
        %410 = vmatprep.subr.mxu0 0.0
        %411 = vmatpush1.msra.mxu0 0.0
        %412 = vmatprep.subr.mxu0 0.0
        %413 = vmatpush1.msra.mxu0 0.0
        %414 = vmatprep.subr.mxu0 0.0
        %415 = vmatpush1.msra.mxu0 0.0
        %416 = vmatprep.subr.mxu0 0.0
        %417 = vmatpush1.msra.mxu0 0.0
        %418 = vmatprep.subr.mxu0 0.0
        %419 = vmatpush1.msra.mxu0 0.0
        %420 = vmatprep.subr.mxu0 0.0
        %421 = vmatpush1.msra.mxu0 0.0
        %422 = vmatprep.subr.mxu0 0.0
        %423 = vmatpush1.msra.mxu0 0.0
        %424 = vmatprep.subr.mxu0 0.0
        %425 = vmatpush1.msra.mxu0 0.0
        %426 = vmatprep.subr.mxu0 0.0
        %427 = vmatpush1.msra.mxu0 0.0
        %428 = vmatprep.subr.mxu0 0.0
        %429 = vmatpush1.msra.mxu0 0.0
        %430 = vmatprep.subr.mxu0 0.0
        %431 = vmatpush1.msra.mxu0 0.0
        %432 = vmatprep.subr.mxu0 0.0
        %433 = vmatpush1.msra.mxu0 0.0
        %434 = vmatprep.subr.mxu0 0.0
        %435 = vmatpush1.msra.mxu0 0.0
        %436 = vmatprep.subr.mxu0 0.0
        %437 = vmatpush1.msra.mxu0 0.0
        %438 = vmatprep.subr.mxu0 0.0
        %439 = vmatpush1.msra.mxu0 0.0
        %440 = vmatprep.subr.mxu0 0.0
        %441 = vmatpush1.msra.mxu0 0.0
        %442 = vmatprep.subr.mxu0 0.0
        %443 = vmatpush1.msra.mxu0 0.0
        %444 = vmatprep.subr.mxu0 0.0
        %445 = vmatpush1.msra.mxu0 0.0
        %446 = vmatprep.subr.mxu0 0.0
        %447 = vmatpush1.msra.mxu0 0.0
        %448 = vmatprep.subr.mxu0 0.0
        %449 = vmatpush1.msra.mxu0 0.0
        %450 = vmatprep.subr.mxu0 0.0
        %451 = vmatpush1.msra.mxu0 0.0
        %452 = vmatprep.subr.mxu0 0.0
        %453 = vmatpush1.msra.mxu0 0.0
        %454 = vmatprep.mubr.f32.mxu0 0.0
        %455 = vmatmul.mubr.f32.gmra.mrb[0].mxu0 %v386
        %v456 = vpop.f32.mrb[0].mxu0
        %v457 = vadd.f32 %v379, %v456
        %v458 = vpop.f32.mrb[0].mxu0
        %459 = vmatprep.mubr.f32.mxu0 0.0
        %460 = vmatmul.mubr.f32.gmra.mrb[0].mxu0 %v388
        %v461 = vpop.f32.mrb[0].mxu0
        %v462 = vadd.f32 %v384, %v461
        %v463 = vpop.f32.mrb[0].mxu0
        %464 = vdwg.mxu0
        %v465 = vmax.f32 %v457, 0.0
        %v466 = vmax.f32 %v462, 0.0
        %467 = vst [vmem:[%s171] sm:$0xff] %v465
        %468 = vst [vmem:[%s171 + $0x8] sm:$0xff] %v466
        %s469 = sand.u32 %s88, 1
        %s470 = scalar_lea.sflag [#allocation4], %s469
        %s471 = sand.u32 %s88, 1
        %s472 = smul.addr %s471, 16
        %s473 = scalar_lea.vmem [#allocation5], %s472
        // Predicated region
        $region33: #{tpu_custom_call.1} parent=27 // pred_check
          %p474 = pneg %p98
        $region34: #{tpu_custom_call.1} parent=27 // pred_check_branch
          %476 = sbr.rel (%p474) target = $region36
        $region35: #{tpu_custom_call.1} parent=27 // pred_region
          %s478 = ssub.s32 256, 256
          %479 = vsyncadd %s470, %s478
          %s480 = smul.addr %s21, 2
          %s481 = sadd.s32 %s22, %s480
          %s482 = smul.addr %s481, 128
          %s483 = scalar_lea.hbm %s2, %s482
          %s484 = sshll.u32 %s473, 4
          %s485 = int_to_ptr.vmem [resolvable:$true] %s484
          %490 = dma.vmem_to_hbm [thread:$0]  %s485, 256, %s483, %s470, 128, 128, 8
        $region36: #{tpu_custom_call.1} parent=27 // pred_fallthru
          _
      $region28: #{tpu_custom_call.1} parent=5 // pred_fallthru
        _
      %p491 = scmp.le.s32.totalorder 2, %s12
      // Predicated region
      $region37: #{tpu_custom_call.1} parent=5 // pred_check
        %p492 = pneg %p491
      $region38: #{tpu_custom_call.1} parent=5 // pred_check_branch
        %494 = sbr.rel (%p492) target = $region40
      $region39: #{tpu_custom_call.1} parent=5 // pred_region
        %s495 = ssub.s32 %s12, 2
        // Predicated region
        $region41: #{tpu_custom_call.1} parent=39 // pred_check
          %p496 = pneg %p104
        $region42: #{tpu_custom_call.1} parent=39 // pred_check_branch
          %498 = sbr.rel (%p496) target = $region44
        $region43: #{tpu_custom_call.1} parent=39 // pred_region
          %s499 = sand.u32 %s89, 1
          %s500 = scalar_lea.sflag [#allocation4], %s499
          %s501 = sand.u32 %s89, 1
          %s502 = smul.addr %s501, 16
          %s503 = scalar_lea.vmem [#allocation5], %s502
          %504 = dma.done %s500, 256
        $region44: #{tpu_custom_call.1} parent=39 // pred_fallthru
          _
      $region40: #{tpu_custom_call.1} parent=5 // pred_fallthru
        _
    $region6: #{tpu_custom_call.1} parent=1 // loop_footer
      %s16 = sadd.s32 1, %s12
    $region7: #{tpu_custom_call.1} parent=1 // loop_footer_branch
      %11 = sbr.rel target = $region3
    $region8: #{tpu_custom_call.1} parent=1 // loop_exit
      _
    %505 = vsyncpa [#allocation3], 1
    %s506 = scalar_lea.sflag [#allocation3], 1
    %507 = vsyncpa %s506, 1
    %508 = vsyncpa [#allocation4], 1
    %s509 = scalar_lea.sflag [#allocation4], 1
    %510 = vsyncpa %s509, 1

</llo_original>
